<compile_context>
chip_gen: v6e
topology: v6e:2x2x1
jax: 0.10.0
libtpu: 0.0.40
codegen_flags: <defaults>
</compile_context>

<pallas_src>
import functools

import jax
import jax.numpy as jnp
from jax.experimental import pallas as pl
from jax.experimental.pallas import tpu as pltpu

LANE = 128
# Set to jnp.bfloat16 to roughly halve HBM traffic for activations/weights
# (epilogue math stays f32); the numerical check below is tuned for f32.
ACT_DTYPE = jnp.float32


def _round_up(x, m):
    return (x + m - 1) // m * m


# ---------------------------------------------------------------------------
# Kernel A: fused 1x1x1 conv + folded-BN + ReLU  (tiled row matmul)
# ---------------------------------------------------------------------------
def _conv1x1_bn_relu_kernel(x_ref, w_ref, b_ref, o_ref):
    y = jnp.dot(x_ref[...], w_ref[...], preferred_element_type=jnp.float32)
    y = jnp.maximum(y + b_ref[...], 0.0)
    o_ref[...] = y.astype(o_ref.dtype)


def conv1x1_bn_relu(x2d, w, b, *, bm=512, out_dtype=None):
    """relu(x2d @ w + b); BN scale pre-folded into w.  x2d: [M, K]."""
    M, K = x2d.shape
    C = w.shape[1]
    out_dtype = out_dtype or x2d.dtype
    bm = min(bm, _round_up(M, 8))        # bounded tile; never the whole slab
    Mp = _round_up(M, bm)
    if Mp != M:
        x2d = jnp.pad(x2d, ((0, Mp - M), (0, 0)))
    out = pl.pallas_call(
        _conv1x1_bn_relu_kernel,
        out_shape=jax.ShapeDtypeStruct((Mp, C), out_dtype),
        grid=(Mp // bm,),
        in_specs=[
            pl.BlockSpec((bm, K), lambda i: (i, 0)),
            pl.BlockSpec((K, C), lambda i: (0, 0)),
            pl.BlockSpec((1, C), lambda i: (0, 0)),
        ],
        out_specs=pl.BlockSpec((bm, C), lambda i: (i, 0)),
        compiler_params=pltpu.CompilerParams(
            dimension_semantics=("parallel",),
            vmem_limit_bytes=32 * 1024 * 1024),
    )(x2d, w, b)
    return out[:M] if Mp != M else out


# ---------------------------------------------------------------------------
# Kernel B: conv2(3x3x3) + BN2 + ReLU -> conv3(1x1) + BN3 ; skip(1x1,stride)
#           + BN_s ; residual add ; ReLU      -- all fused, one output block
# ---------------------------------------------------------------------------
def _tail_kernel(p0_ref, p1_ref, p2_ref, xs_ref, w2_ref, b2_ref,
                 w3_ref, b3_ref, ws_ref, bs_ref, out_ref, *, s, Ho, Wo):
    slabs = (p0_ref, p1_ref, p2_ref)     # one phase-depth plane per kd tap
    M = Ho * Wo
    cmid = w2_ref.shape[1]
    acc = jnp.zeros((M, w2_ref.shape[2]), jnp.float32)
    # 3x3x3 conv as 27 small matmuls; tap (kd,kh,kw) reads phase (kh%s, kw%s)
    # of depth slab kd at static offsets (kh//s, kw//s) -- contiguous slices,
    # no strided access and no im2col slab.
    for kd in range(3):
        slab = slabs[kd]
        for kh in range(3):
            for kw in range(3):
                pp = (kh % s) * s + (kw % s)
                t = slab[0, pp, kh // s:kh // s + Ho, kw // s:kw // s + Wo, :]
                acc += jnp.dot(t.reshape(M, cmid),
                               w2_ref[kd * 9 + kh * 3 + kw],
                               preferred_element_type=jnp.float32)
    y2 = jnp.maximum(acc + b2_ref[...], 0.0)                         # bn2+relu
    y3 = jnp.dot(y2.astype(w3_ref.dtype), w3_ref[...],
                 preferred_element_type=jnp.float32) + b3_ref[...]   # conv3+bn3
    ide = jnp.dot(xs_ref[0, 0].reshape(M, ws_ref.shape[0]), ws_ref[...],
                  preferred_element_type=jnp.float32) + bs_ref[...]  # skip+bn
    out = jnp.maximum(y3 + ide, 0.0)
    out_ref[...] = out.reshape(out_ref.shape).astype(out_ref.dtype)


# ---------------------------------------------------------------------------
# Glue: BN folding, channel padding, stride-phase decomposition (plain XLA)
# ---------------------------------------------------------------------------
def fold_bn(gamma, beta, mean, var, eps=1e-5):
    scale = gamma * jax.lax.rsqrt(var + eps)
    return scale, beta - mean * scale


def _embed(mat, rows, cols, dtype):
    out = jnp.zeros((rows, cols), dtype)
    return out.at[:mat.shape[0], :mat.shape[1]].set(mat.astype(dtype))


def _phase_decompose(y, s):
    """Pad y spatially by 1, split each spatial dim into `s` stride phases.

    y: [N, D, H, W, C] -> [N*s*Dq, s*s, Hq, Wq, C]; leading index encodes
    (n, depth_phase, depth_block), second index encodes (h_phase*s + w_phase).
    Every conv2 tap then becomes a contiguous slice of one plane.
    """
    N, D, H, W, C = y.shape
    Dq = -(-(D + 2) // s)
    Hq = -(-(H + 2) // s)
    Wq = -(-(W + 2) // s)
    yp = jnp.pad(y, ((0, 0),
                     (1, Dq * s - D - 1),
                     (1, Hq * s - H - 1),
                     (1, Wq * s - W - 1),
                     (0, 0)))
    yr = yp.reshape(N, Dq, s, Hq, s, Wq, s, C)
    yt = jnp.transpose(yr, (0, 2, 1, 4, 6, 3, 5, 7))  # N, sd, Dq, sh, sw, Hq, Wq, C
    return yt.reshape(N * s * Dq, s * s, Hq, Wq, C), (Dq, Hq, Wq)


# ---------------------------------------------------------------------------
# BasicBlock forward
# ---------------------------------------------------------------------------
def basic_block_forward(x_ncdhw, params, stride):
    N, Cin, D, H, W = x_ncdhw.shape
    Cmid = params["w1"].shape[0]
    Cout = params["w3"].shape[0]
    s = int(stride)
    Do, Ho, Wo = (D - 1) // s + 1, (H - 1) // s + 1, (W - 1) // s + 1
    Cin_p, Cmid_p, Cout_p = (_round_up(c, LANE) for c in (Cin, Cmid, Cout))

    # NCDHW -> NDHWC with channels zero-padded to lane width (lane-dense).
    # TODO(synk): keep the surrounding model channels-last to avoid this pass.
    x = jnp.transpose(x_ncdhw, (0, 2, 3, 4, 1))
    xc = jnp.pad(x, ((0, 0),) * 4 + ((0, Cin_p - Cin),)).astype(ACT_DTYPE)

    # ---- conv1 (1x1x1) + bn1 + relu (kernel A) -----------------------------
    s1, b1 = fold_bn(*params["bn1"])
    w1f = _embed(params["w1"].reshape(Cmid, Cin).T * s1[None, :],
                 Cin_p, Cmid_p, ACT_DTYPE)
    b1f = jnp.pad(b1, (0, Cmid_p - Cmid)).reshape(1, Cmid_p).astype(jnp.float32)
    y1 = conv1x1_bn_relu(xc.reshape(-1, Cin_p), w1f, b1f, bm=512,
                         out_dtype=ACT_DTYPE)
    y1 = y1.reshape(N, D, H, W, Cmid_p)

    # ---- stride-phase view of padded y1 (XLA reshuffle, ~1x data) ----------
    y1ph, (Dq, Hq, Wq) = _phase_decompose(y1, s)

    # ---- strided input for the skip branch ----------------------------------
    xs = xc[:, ::s, ::s, ::s, :][:, :Do, :Ho, :Wo, :]

    # ---- BN-folded, lane-padded weights for the fused tail kernel ----------
    s2, b2 = fold_bn(*params["bn2"])
    w2m = (jnp.transpose(params["w2"], (2, 3, 4, 1, 0)).reshape(27, Cmid, Cmid)
           * s2[None, None, :])
    w2f = jnp.zeros((27, Cmid_p, Cmid_p), ACT_DTYPE).at[:, :Cmid, :Cmid].set(
        w2m.astype(ACT_DTYPE))
    b2f = jnp.pad(b2, (0, Cmid_p - Cmid)).reshape(1, Cmid_p).astype(jnp.float32)

    s3, b3 = fold_bn(*params["bn3"])
    w3f = _embed(params["w3"].reshape(Cout, Cmid).T * s3[None, :],
                 Cmid_p, Cout_p, ACT_DTYPE)
    b3f = jnp.pad(b3, (0, Cout_p - Cout)).reshape(1, Cout_p).astype(jnp.float32)

    ss, bs = fold_bn(*params["bns"])
    wsf = _embed(params["wskip"].reshape(Cout, Cin).T * ss[None, :],
                 Cin_p, Cout_p, ACT_DTYPE)
    bsf = jnp.pad(bs, (0, Cout_p - Cout)).reshape(1, Cout_p).astype(jnp.float32)

    # ---- fused tail kernel (kernel B) ---------------------------------------
    def slab_spec(kd):
        return pl.BlockSpec(
            (1, s * s, Hq, Wq, Cmid_p),
            lambda n, do, kd=kd: ((n * s + kd % s) * Dq + do + kd // s,
                                  0, 0, 0, 0))

    const2 = lambda n, do: (0, 0)
    const3 = lambda n, do: (0, 0, 0)

    out_p = pl.pallas_call(
        functools.partial(_tail_kernel, s=s, Ho=Ho, Wo=Wo),
        out_shape=jax.ShapeDtypeStruct((N, Do, Ho, Wo, Cout_p), x_ncdhw.dtype),
        grid=(N, Do),
        in_specs=[
            slab_spec(0), slab_spec(1), slab_spec(2),
            pl.BlockSpec((1, 1, Ho, Wo, Cin_p), lambda n, do: (n, do, 0, 0, 0)),
            pl.BlockSpec((27, Cmid_p, Cmid_p), const3),
            pl.BlockSpec((1, Cmid_p), const2),
            pl.BlockSpec((Cmid_p, Cout_p), const2),
            pl.BlockSpec((1, Cout_p), const2),
            pl.BlockSpec((Cin_p, Cout_p), const2),
            pl.BlockSpec((1, Cout_p), const2),
        ],
        out_specs=pl.BlockSpec((1, 1, Ho, Wo, Cout_p),
                               lambda n, do: (n, do, 0, 0, 0)),
        compiler_params=pltpu.CompilerParams(
            dimension_semantics=("parallel", "parallel"),
            vmem_limit_bytes=32 * 1024 * 1024),
    )(y1ph, y1ph, y1ph, xs, w2f, b2f, w3f, b3f, wsf, bsf)

    out = out_p[..., :Cout]                               # strip lane padding
    return jnp.transpose(out, (0, 4, 1, 2, 3))            # back to NCDHW


# ---------------------------------------------------------------------------
# Pure-JAX reference (eval-mode BN) for correctness checking
# ---------------------------------------------------------------------------
def ref_forward(x, params, stride):
    def conv(h, w, s, pad):
        return jax.lax.conv_general_dilated(
            h, w, window_strides=(s, s, s), padding=[(pad, pad)] * 3,
            dimension_numbers=("NCDHW", "OIDHW", "NCDHW"))

    def bn(h, p):
        g, b, m, v = (t[None, :, None, None, None] for t in p)
        return (h - m) / jnp.sqrt(v + 1e-5) * g + b

    ide = bn(conv(x, params["wskip"], stride, 0), params["bns"])
    h = jax.nn.relu(bn(conv(x, params["w1"], 1, 0), params["bn1"]))
    h = jax.nn.relu(bn(conv(h, params["w2"], stride, 1), params["bn2"]))
    h = bn(conv(h, params["w3"], 1, 0), params["bn3"])
    return jax.nn.relu(h + ide)


# ---------------------------------------------------------------------------
if __name__ == "__main__":
    inc, outc, stride = 4, 8, 2
    N, D, H, W = 2, 8, 8, 8

    key = jax.random.PRNGKey(0)
    ks = jax.random.split(key, 10)

    def bn_params(k, c):
        k1, k2, k3, k4 = jax.random.split(k, 4)
        gamma = 1.0 + 0.1 * jax.random.normal(k1, (c,), jnp.float32)
        beta = 0.1 * jax.random.normal(k2, (c,), jnp.float32)
        mean = 0.1 * jax.random.normal(k3, (c,), jnp.float32)
        var = 0.9 + 0.2 * jax.random.uniform(k4, (c,), jnp.float32)
        return gamma, beta, mean, var

    params = {
        "w1": 0.2 * jax.random.normal(ks[0], (inc, inc, 1, 1, 1), jnp.float32),
        "bn1": bn_params(ks[1], inc),
        "w2": 0.2 * jax.random.normal(ks[2], (inc, inc, 3, 3, 3), jnp.float32),
        "bn2": bn_params(ks[3], inc),
        "w3": 0.2 * jax.random.normal(ks[4], (outc, inc, 1, 1, 1), jnp.float32),
        "bn3": bn_params(ks[5], outc),
        "wskip": 0.2 * jax.random.normal(ks[6], (outc, inc, 1, 1, 1), jnp.float32),
        "bns": bn_params(ks[7], outc),
    }

    x = jax.random.normal(ks[8], (N, inc, D, H, W), jnp.float32)

    out = jax.block_until_ready(basic_block_forward(x, params, stride))
    ref = jax.block_until_ready(ref_forward(x, params, stride))

    assert out.shape == ref.shape, (out.shape, ref.shape)
    max_err = float(jnp.max(jnp.abs(out - ref)))
    if max_err > 2e-3:
        raise SystemExit(f"mismatch vs reference: max abs err = {max_err}")
    print("KERNEL_OK")
</pallas_src>

<mosaic_0001>
module attributes {stable_mosaic.version = 11 : i64} {
  func.func @_conv1x1_bn_relu_kernel(%arg0: i32, %arg1: memref<512x128xf32, #tpu.memory_space<vmem>>, %arg2: memref<128x128xf32, #tpu.memory_space<vmem>>, %arg3: memref<1x128xf32, #tpu.memory_space<vmem>>, %arg4: memref<512x128xf32, #tpu.memory_space<vmem>>) attributes {dimension_semantics = [#tpu.dimension_semantics<parallel>], iteration_bounds = array<i64: 2>, scalar_prefetch = 0 : i64, scratch_operands = 0 : i64, tpu.core_type = #tpu.core_type<tc>, window_params = [{transform_indices = @transform_0, window_bounds = array<i64: 512, 128>}, {pipeline_mode = #tpu.pipeline_mode<synchronous>, transform_indices = @transform_1, window_bounds = array<i64: 128, 128>}, {pipeline_mode = #tpu.pipeline_mode<synchronous>, transform_indices = @transform_2, window_bounds = array<i64: 1, 128>}, {transform_indices = @transform_3, window_bounds = array<i64: 512, 128>}]} {
    %c0 = arith.constant 0 : index
    %c0_0 = arith.constant 0 : index
    %0 = vector.load %arg1[%c0, %c0_0] : memref<512x128xf32, #tpu.memory_space<vmem>>, vector<512x128xf32>
    %c0_1 = arith.constant 0 : index
    %c0_2 = arith.constant 0 : index
    %1 = vector.load %arg2[%c0_1, %c0_2] : memref<128x128xf32, #tpu.memory_space<vmem>>, vector<128x128xf32>
    %cst = arith.constant dense<0.000000e+00> : vector<512x128xf32>
    %2 = tpu.matmul %0, %1, %cst {dimension_numbers = #tpu.dot_dimension_numbers<[1], [0], [0], [1], [0, 0, 1, 1], [], []>} : vector<512x128xf32>, vector<128x128xf32>, vector<512x128xf32> -> vector<512x128xf32>
    %c0_3 = arith.constant 0 : index
    %c0_4 = arith.constant 0 : index
    %3 = vector.load %arg3[%c0_3, %c0_4] : memref<1x128xf32, #tpu.memory_space<vmem>>, vector<1x128xf32>
    %4 = vector.broadcast %3 : vector<1x128xf32> to vector<512x128xf32>
    %5 = arith.addf %2, %4 : vector<512x128xf32>
    %cst_5 = arith.constant 0.000000e+00 : f32
    %6 = vector.broadcast %cst_5 : f32 to vector<512x128xf32>
    %7 = arith.maximumf %5, %6 : vector<512x128xf32>
    %c0_6 = arith.constant 0 : index
    %c0_7 = arith.constant 0 : index
    %8 = vector.load %arg4[%c0_6, %c0_7] : memref<512x128xf32, #tpu.memory_space<vmem>>, vector<512x128xf32>
    tpu.vector_store %arg4[%c0_6, %c0_7], %7 {strides = array<i32>} : memref<512x128xf32, #tpu.memory_space<vmem>>, vector<512x128xf32>,
    return
  }
  func.func @transform_0(%arg0: i32) -> (i32, i32) {
    %c0_i32 = arith.constant 0 : i32
    %c0_i32_0 = arith.constant 0 : i32
    return %arg0, %c0_i32 : i32, i32
  }
  func.func @transform_1(%arg0: i32) -> (i32, i32) {
    %c0_i32 = arith.constant 0 : i32
    %c0_i32_0 = arith.constant 0 : i32
    %c0_i32_1 = arith.constant 0 : i32
    return %c0_i32, %c0_i32_0 : i32, i32
  }
  func.func @transform_2(%arg0: i32) -> (i32, i32) {
    %c0_i32 = arith.constant 0 : i32
    %c0_i32_0 = arith.constant 0 : i32
    %c0_i32_1 = arith.constant 0 : i32
    return %c0_i32, %c0_i32_0 : i32, i32
  }
  func.func @transform_3(%arg0: i32) -> (i32, i32) {
    %c0_i32 = arith.constant 0 : i32
    %c0_i32_0 = arith.constant 0 : i32
    return %arg0, %c0_i32 : i32, i32
  }
}

</mosaic_0001>

<llo_original>
// kernel: tpu_custom_call.1
$region0: #{tpu_custom_call.1}
  #allocation0 [shape = 'u32[]', space=smem, size = 0x4, offset = 0x4, fixed_abs, tag = 'smem constant byte address 0x4 - core index']
  #allocation1 [shape = 'u32[144,128]{1,0:T(1,128)}', space=vmem, size = 0x12000, scoped, tag = 'internal scratch']
  %s0 = inlined_call_operand.hbm [shape: f32[1024,128], index: 0, kind: input, shape index: {}]
  %s1 = inlined_call_operand.hbm [shape: f32[128,128], index: 1, kind: input, shape index: {}]
  %s2 = inlined_call_operand.vmem [shape: f32[1,128], index: 2, kind: input, shape index: {}]
  %s3 = inlined_call_operand.hbm [shape: f32[1024,128], index: 3, kind: output, shape index: {}]
  %s4 = sld [smem:[#allocation0]]
  $region53: #{tpu_custom_call.1} parent=0
    _
  %s6 = ssub.s32 1, %s4
  %s7 = scalar_select 0, %s6, %s4
  $region1: #{tpu_custom_call.1} parent=0
    #allocation2 [shape = 'u8[524288]{0}', space=vmem, size = 0x80000, scoped, tag = 'input window, operand 0']
    #allocation3 [shape = 's32[2]{0}', space=sflag, size = 0x8, scoped, tag = 'scoped memory for tpu_custom_call.1']
    #allocation4 [shape = 's32[2]{0}', space=sflag, size = 0x8, scoped, tag = 'scoped memory for tpu_custom_call.1']
    #allocation5 [shape = 'u8[65536]{0}', space=vmem, size = 0x10000, scoped, tag = 'input window, operand 1, single buffered']
    #allocation6 [shape = 's32[1]{0}', space=sflag, size = 0x4, scoped, tag = 'scoped memory for tpu_custom_call.1']
    #allocation7 [shape = 'u8[524288]{0}', space=vmem, size = 0x80000, scoped, tag = 'output window, operand 0']
    %8 = vsyncpa [#allocation3], 0
    %s9 = scalar_lea.sflag [#allocation3], 1
    %10 = vsyncpa %s9, 0
    %11 = vsyncpa [#allocation6], 0
    %12 = vsyncpa [#allocation4], 0
    %s13 = scalar_lea.sflag [#allocation4], 1
    %14 = vsyncpa %s13, 0
    loop: start=0, step=1, limit=4
    $region2: #{tpu_custom_call.1} parent=1 // loop_pre_header
      _
    $region3: #{tpu_custom_call.1} parent=1 // loop_header
      %s16 = sphi 0, %s20
      %p17 = scmp.ge.s32.totalorder %s16, 4
      %s26 = sphi 0, %s28
      %s29 = sphi 0, %s26
      %s30 = sphi 0, %s29
      %s46 = sphi 0, %s30
      %s50 = sphi 0, %s50
      %s52 = sphi 0, %s50
      %s53 = sphi 0, %s52
      %s67 = sphi 0, %s53
      %s71 = sphi 0, %s71
      %s73 = sphi 0, %s71
      %s74 = sphi 0, %s73
      %s88 = sphi 0, %s74
      %s94 = sphi 0, %s96
      %s97 = sphi 0, %s94
      %s98 = sphi 0, %s97
      %s114 = sphi 0, %s98
    $region4: #{tpu_custom_call.1} parent=1 // loop_header_branch
      %19 = sbr.rel (%p17) target = $region8
    $region5: #{tpu_custom_call.1} parent=1 // loop_body
      %s21 = ssub.s32 %s16, 1
      %s22 = ssub.s32 %s16, 2
      %s23 = sadd.s32 %s16, 1
      %s24 = ssub.s32 %s16, %s23
      %p25 = scmp.eq.s32.totalorder %s24, 0
      %s27 = sadd.s32 %s26, 1
      %s28 = scalar_select %p25, %s26, %s27
      %p31 = pneg %p25
      %p32 = scmp.eq.s32.totalorder %s16, 1
      %p33 = por %p31, %p32
      %p34 = scmp.ne.s32.totalorder %s26, %s29
      %p35 = scmp.eq.s32.totalorder %s16, 0
      %p36 = por %p34, %p35
      %p37 = scmp.ne.s32.totalorder %s26, %s29
      %p38 = scmp.eq.s32.totalorder %s21, 1
      %p39 = por %p37, %p38
      %p40 = scmp.ne.s32.totalorder %s29, %s30
      %p41 = scmp.eq.s32.totalorder %s21, 0
      %p42 = por %p40, %p41
      %p43 = scmp.ne.s32.totalorder %s29, %s30
      %p44 = scmp.eq.s32.totalorder %s22, 1
      %p45 = por %p43, %p44
      %p47 = scmp.ne.s32.totalorder %s30, %s46
      %p48 = scmp.eq.s32.totalorder %s22, 0
      %p49 = por %p47, %p48
      %s51 = sadd.s32 %s50, 1
      %p54 = scmp.eq.s32.totalorder %s16, 1
      %p55 = scmp.ne.s32.totalorder %s50, %s52
      %p56 = scmp.eq.s32.totalorder %s16, 0
      %p57 = por %p55, %p56
      %p58 = scmp.ne.s32.totalorder %s50, %s52
      %p59 = scmp.eq.s32.totalorder %s21, 1
      %p60 = por %p58, %p59
      %p61 = scmp.ne.s32.totalorder %s52, %s53
      %p62 = scmp.eq.s32.totalorder %s21, 0
      %p63 = por %p61, %p62
      %p64 = scmp.ne.s32.totalorder %s52, %s53
      %p65 = scmp.eq.s32.totalorder %s22, 1
      %p66 = por %p64, %p65
      %p68 = scmp.ne.s32.totalorder %s53, %s67
      %p69 = scmp.eq.s32.totalorder %s22, 0
      %p70 = por %p68, %p69
      %s72 = sadd.s32 %s71, 1
      %p75 = scmp.eq.s32.totalorder %s16, 1
      %p76 = scmp.ne.s32.totalorder %s71, %s73
      %p77 = scmp.eq.s32.totalorder %s16, 0
      %p78 = por %p76, %p77
      %p79 = scmp.ne.s32.totalorder %s71, %s73
      %p80 = scmp.eq.s32.totalorder %s21, 1
      %p81 = por %p79, %p80
      %p82 = scmp.ne.s32.totalorder %s73, %s74
      %p83 = scmp.eq.s32.totalorder %s21, 0
      %p84 = por %p82, %p83
      %p85 = scmp.ne.s32.totalorder %s73, %s74
      %p86 = scmp.eq.s32.totalorder %s22, 1
      %p87 = por %p85, %p86
      %p89 = scmp.ne.s32.totalorder %s74, %s88
      %p90 = scmp.eq.s32.totalorder %s22, 0
      %p91 = por %p89, %p90
      %s92 = ssub.s32 %s16, %s23
      %p93 = scmp.eq.s32.totalorder %s92, 0
      %s95 = sadd.s32 %s94, 1
      %s96 = scalar_select %p93, %s94, %s95
      %p99 = pneg %p93
      %p100 = scmp.eq.s32.totalorder %s16, 1
      %p101 = por %p99, %p100
      %p102 = scmp.ne.s32.totalorder %s94, %s97
      %p103 = scmp.eq.s32.totalorder %s16, 0
      %p104 = por %p102, %p103
      %p105 = scmp.ne.s32.totalorder %s94, %s97
      %p106 = scmp.eq.s32.totalorder %s21, 1
      %p107 = por %p105, %p106
      %p108 = scmp.ne.s32.totalorder %s97, %s98
      %p109 = scmp.eq.s32.totalorder %s21, 0
      %p110 = por %p108, %p109
      %p111 = scmp.ne.s32.totalorder %s97, %s98
      %p112 = scmp.eq.s32.totalorder %s22, 1
      %p113 = por %p111, %p112
      %p115 = scmp.ne.s32.totalorder %s98, %s114
      %p116 = scmp.eq.s32.totalorder %s22, 0
      %p117 = por %p115, %p116
      %p118 = scmp.le.s32.totalorder 1, %s16
      %p119 = scmp.lt.s32.totalorder %s16, 3
      %p120 = pnand %p118, %p119
      %p121 = pneg %p120
      // Predicated region
      $region9: #{tpu_custom_call.1} parent=5 // pred_check
        _
      $region10: #{tpu_custom_call.1} parent=5 // pred_check_branch
        %123 = sbr.rel (%p120) target = $region12
      $region11: #{tpu_custom_call.1} parent=5 // pred_region
        %s124 = ssub.s32 %s16, 1
        // Predicated region
        $region13: #{tpu_custom_call.1} parent=11 // pred_check
          %p125 = pneg %p63
        $region14: #{tpu_custom_call.1} parent=11 // pred_check_branch
          %127 = sbr.rel (%p125) target = $region16
        $region15: #{tpu_custom_call.1} parent=11 // pred_region
          %s129 = ssub.s32 2048, 2048
          %130 = vsyncadd [#allocation6], %s129
          %s131 = sshll.u32 [#allocation5], 4
          %s132 = int_to_ptr.vmem [resolvable:$true] %s131
          %137 = dma.hbm_to_vmem [thread:$0]  %s1, 2048, %s132, [#allocation6], 128, 128, 8
        $region16: #{tpu_custom_call.1} parent=11 // pred_fallthru
          _
        // Predicated region
        $region17: #{tpu_custom_call.1} parent=11 // pred_check
          %p138 = pneg %p84
        $region18: #{tpu_custom_call.1} parent=11 // pred_check_branch
          %140 = sbr.rel (%p138) target = $region20
        $region19: #{tpu_custom_call.1} parent=11 // pred_region
          _
        $region20: #{tpu_custom_call.1} parent=11 // pred_fallthru
          _
      $region12: #{tpu_custom_call.1} parent=5 // pred_fallthru
        _
      %p141 = scmp.lt.s32.totalorder %s16, 2
      // Predicated region
      $region21: #{tpu_custom_call.1} parent=5 // pred_check
        %p142 = pneg %p141
      $region22: #{tpu_custom_call.1} parent=5 // pred_check_branch
        %144 = sbr.rel (%p142) target = $region24
      $region23: #{tpu_custom_call.1} parent=5 // pred_region
        // Predicated region
        $region25: #{tpu_custom_call.1} parent=23 // pred_check
          %p145 = pneg %p36
        $region26: #{tpu_custom_call.1} parent=23 // pred_check_branch
          %147 = sbr.rel (%p145) target = $region28
        $region27: #{tpu_custom_call.1} parent=23 // pred_region
          %s148 = sand.u32 %s26, 1
          %s149 = scalar_lea.sflag [#allocation3], %s148
          %s150 = sand.u32 %s26, 1
          %s151 = smul.addr %s150, 512
          %s152 = scalar_lea.vmem [#allocation2], %s151
          %s153 = smul.u32 64, %s16
          %s155 = ssub.s32 8192, 8192
          %156 = vsyncadd %s149, %s155
          %s157 = smul.addr %s153, 128
          %s158 = scalar_lea.hbm %s0, %s157
          %s159 = sshll.u32 %s152, 4
          %s160 = int_to_ptr.vmem [resolvable:$true] %s159
          %165 = dma.hbm_to_vmem [thread:$0]  %s158, 8192, %s160, %s149, 128, 128, 8
        $region28: #{tpu_custom_call.1} parent=23 // pred_fallthru
          _
      $region24: #{tpu_custom_call.1} parent=5 // pred_fallthru
        _
      %p166 = scmp.le.s32.totalorder 1, %s16
      %p167 = scmp.lt.s32.totalorder %s16, 3
      %p168 = pnand %p166, %p167
      %p169 = pneg %p168
      // Predicated region
      $region29: #{tpu_custom_call.1} parent=5 // pred_check
        _
      $region30: #{tpu_custom_call.1} parent=5 // pred_check_branch
        %171 = sbr.rel (%p168) target = $region32
      $region31: #{tpu_custom_call.1} parent=5 // pred_region
        %s172 = ssub.s32 %s16, 1
        %s173 = sand.u32 %s29, 1
        %s174 = scalar_lea.sflag [#allocation3], %s173
        %s175 = sand.u32 %s29, 1
        %s176 = smul.addr %s175, 512
        %s177 = scalar_lea.vmem [#allocation2], %s176
        // Predicated region
        $region33: #{tpu_custom_call.1} parent=31 // pred_check
          %p178 = pneg %p42
        $region34: #{tpu_custom_call.1} parent=31 // pred_check_branch
          %180 = sbr.rel (%p178) target = $region36
        $region35: #{tpu_custom_call.1} parent=31 // pred_region
          %181 = dma.done %s174, 8192
        $region36: #{tpu_custom_call.1} parent=31 // pred_fallthru
          _
        // Predicated region
        $region37: #{tpu_custom_call.1} parent=31 // pred_check
          %p182 = pneg %p63
        $region38: #{tpu_custom_call.1} parent=31 // pred_check_branch
          %184 = sbr.rel (%p182) target = $region40
        $region39: #{tpu_custom_call.1} parent=31 // pred_region
          %185 = dma.done [#allocation6], 2048
        $region40: #{tpu_custom_call.1} parent=31 // pred_fallthru
          _
        %s186 = sand.u32 %s29, 1
        %s187 = scalar_lea.sflag [#allocation3], %s186
        %s188 = sand.u32 %s29, 1
        %s189 = smul.addr %s188, 512
        %s190 = scalar_lea.vmem [#allocation2], %s189
        %p191 = pneg %p42
        %p192 = pneg %p39
        %p193 = pneg %p63
        %p194 = pneg %p60
        %p195 = pneg %p84
        %p196 = pneg %p81
        %p197 = pneg %p110
        %p198 = pneg %p107
        %s199 = sand.u32 %s97, 1
        %s200 = scalar_lea.sflag [#allocation4], %s199
        %s201 = sand.u32 %s97, 1
        %s202 = smul.addr %s201, 512
        %s203 = scalar_lea.vmem [#allocation7], %s202
        %s204 = smul.u32 64, %s21
        %s205 = smul.u32 64, %s21
        %v206 = vld [vmem:[%s177] sm:$0xff]
        %v207 = vld [vmem:[%s177 + $0x8] sm:$0xff]
        %v208 = vld [vmem:[%s177 + $0x10] sm:$0xff]
        %v209 = vld [vmem:[%s177 + $0x18] sm:$0xff]
        %v210 = vld [vmem:[%s177 + $0x20] sm:$0xff]
        %v211 = vld [vmem:[%s177 + $0x28] sm:$0xff]
        %v212 = vld [vmem:[%s177 + $0x30] sm:$0xff]
        %v213 = vld [vmem:[%s177 + $0x38] sm:$0xff]
        %v214 = vld [vmem:[%s177 + $0x40] sm:$0xff]
        %v215 = vld [vmem:[%s177 + $0x48] sm:$0xff]
        %v216 = vld [vmem:[%s177 + $0x50] sm:$0xff]
        %v217 = vld [vmem:[%s177 + $0x58] sm:$0xff]
        %v218 = vld [vmem:[%s177 + $0x60] sm:$0xff]
        %v219 = vld [vmem:[%s177 + $0x68] sm:$0xff]
        %v220 = vld [vmem:[%s177 + $0x70] sm:$0xff]
        %v221 = vld [vmem:[%s177 + $0x78] sm:$0xff]
        %v222 = vld [vmem:[%s177 + $0x80] sm:$0xff]
        %v223 = vld [vmem:[%s177 + $0x88] sm:$0xff]
        %v224 = vld [vmem:[%s177 + $0x90] sm:$0xff]
        %v225 = vld [vmem:[%s177 + $0x98] sm:$0xff]
        %v226 = vld [vmem:[%s177 + $0xa0] sm:$0xff]
        %v227 = vld [vmem:[%s177 + $0xa8] sm:$0xff]
        %v228 = vld [vmem:[%s177 + $0xb0] sm:$0xff]
        %v229 = vld [vmem:[%s177 + $0xb8] sm:$0xff]
        %v230 = vld [vmem:[%s177 + $0xc0] sm:$0xff]
        %v231 = vld [vmem:[%s177 + $0xc8] sm:$0xff]
        %v232 = vld [vmem:[%s177 + $0xd0] sm:$0xff]
        %v233 = vld [vmem:[%s177 + $0xd8] sm:$0xff]
        %v234 = vld [vmem:[%s177 + $0xe0] sm:$0xff]
        %v235 = vld [vmem:[%s177 + $0xe8] sm:$0xff]
        %v236 = vld [vmem:[%s177 + $0xf0] sm:$0xff]
        %v237 = vld [vmem:[%s177 + $0xf8] sm:$0xff]
        %v238 = vld [vmem:[%s177 + $0x100] sm:$0xff]
        %v239 = vld [vmem:[%s177 + $0x108] sm:$0xff]
        %v240 = vld [vmem:[%s177 + $0x110] sm:$0xff]
        %v241 = vld [vmem:[%s177 + $0x118] sm:$0xff]
        %v242 = vld [vmem:[%s177 + $0x120] sm:$0xff]
        %v243 = vld [vmem:[%s177 + $0x128] sm:$0xff]
        %v244 = vld [vmem:[%s177 + $0x130] sm:$0xff]
        %v245 = vld [vmem:[%s177 + $0x138] sm:$0xff]
        %v246 = vld [vmem:[%s177 + $0x140] sm:$0xff]
        %v247 = vld [vmem:[%s177 + $0x148] sm:$0xff]
        %v248 = vld [vmem:[%s177 + $0x150] sm:$0xff]
        %v249 = vld [vmem:[%s177 + $0x158] sm:$0xff]
        %v250 = vld [vmem:[%s177 + $0x160] sm:$0xff]
        %v251 = vld [vmem:[%s177 + $0x168] sm:$0xff]
        %v252 = vld [vmem:[%s177 + $0x170] sm:$0xff]
        %v253 = vld [vmem:[%s177 + $0x178] sm:$0xff]
        %v254 = vld [vmem:[%s177 + $0x180] sm:$0xff]
        %v255 = vld [vmem:[%s177 + $0x188] sm:$0xff]
        %v256 = vld [vmem:[%s177 + $0x190] sm:$0xff]
        %v257 = vld [vmem:[%s177 + $0x198] sm:$0xff]
        %v258 = vld [vmem:[%s177 + $0x1a0] sm:$0xff]
        %v259 = vld [vmem:[%s177 + $0x1a8] sm:$0xff]
        %v260 = vld [vmem:[%s177 + $0x1b0] sm:$0xff]
        %v261 = vld [vmem:[%s177 + $0x1b8] sm:$0xff]
        %v262 = vld [vmem:[%s177 + $0x1c0] sm:$0xff]
        %v263 = vld [vmem:[%s177 + $0x1c8] sm:$0xff]
        %v264 = vld [vmem:[%s177 + $0x1d0] sm:$0xff]
        %v265 = vld [vmem:[%s177 + $0x1d8] sm:$0xff]
        %v266 = vld [vmem:[%s177 + $0x1e0] sm:$0xff]
        %v267 = vld [vmem:[%s177 + $0x1e8] sm:$0xff]
        %v268 = vld [vmem:[%s177 + $0x1f0] sm:$0xff]
        %v269 = vld [vmem:[%s177 + $0x1f8] sm:$0xff]
        %v270 = vld [vmem:[#allocation5] sm:$0xff]
        %v271 = vld [vmem:[#allocation5 + $0x8] sm:$0xff]
        %v272 = vld [vmem:[#allocation5 + $0x10] sm:$0xff]
        %v273 = vld [vmem:[#allocation5 + $0x18] sm:$0xff]
        %v274 = vld [vmem:[#allocation5 + $0x20] sm:$0xff]
        %v275 = vld [vmem:[#allocation5 + $0x28] sm:$0xff]
        %v276 = vld [vmem:[#allocation5 + $0x30] sm:$0xff]
        %v277 = vld [vmem:[#allocation5 + $0x38] sm:$0xff]
        %v278 = vld [vmem:[#allocation5 + $0x40] sm:$0xff]
        %v279 = vld [vmem:[#allocation5 + $0x48] sm:$0xff]
        %v280 = vld [vmem:[#allocation5 + $0x50] sm:$0xff]
        %v281 = vld [vmem:[#allocation5 + $0x58] sm:$0xff]
        %v282 = vld [vmem:[#allocation5 + $0x60] sm:$0xff]
        %v283 = vld [vmem:[#allocation5 + $0x68] sm:$0xff]
        %v284 = vld [vmem:[#allocation5 + $0x70] sm:$0xff]
        %v285 = vld [vmem:[#allocation5 + $0x78] sm:$0xff]
        %v286 = vld [vmem:[%s2] sm:$0x1]
        %v288 = vlaneseq
        %v289 = vshrl.u32 %v288, 7
        %v290 = vsub.s32 0, %v289
        %v291 = vrot.slane %v286, %v290
        %293 = vmatprep.subr.mxu0 0.0
        %294 = vmatpush1.msra.mxu0 %v285
        %295 = vmatprep.subr.mxu0 0.0
        %296 = vmatpush1.msra.mxu0 %v284
        %297 = vmatprep.subr.mxu0 0.0
        %298 = vmatpush1.msra.mxu0 %v283
        %299 = vmatprep.subr.mxu0 0.0
        %300 = vmatpush1.msra.mxu0 %v282
        %301 = vmatprep.subr.mxu0 0.0
        %302 = vmatpush1.msra.mxu0 %v281
        %303 = vmatprep.subr.mxu0 0.0
        %304 = vmatpush1.msra.mxu0 %v280
        %305 = vmatprep.subr.mxu0 0.0
        %306 = vmatpush1.msra.mxu0 %v279
        %307 = vmatprep.subr.mxu0 0.0
        %308 = vmatpush1.msra.mxu0 %v278
        %309 = vmatprep.subr.mxu0 0.0
        %310 = vmatpush1.msra.mxu0 %v277
        %311 = vmatprep.subr.mxu0 0.0
        %312 = vmatpush1.msra.mxu0 %v276
        %313 = vmatprep.subr.mxu0 0.0
        %314 = vmatpush1.msra.mxu0 %v275
        %315 = vmatprep.subr.mxu0 0.0
        %316 = vmatpush1.msra.mxu0 %v274
        %317 = vmatprep.subr.mxu0 0.0
        %318 = vmatpush1.msra.mxu0 %v273
        %319 = vmatprep.subr.mxu0 0.0
        %320 = vmatpush1.msra.mxu0 %v272
        %321 = vmatprep.subr.mxu0 0.0
        %322 = vmatpush1.msra.mxu0 %v271
        %323 = vmatprep.subr.mxu0 0.0
        %324 = vmatpush1.msra.mxu0 %v270
        %325 = vmatprep.subr.mxu0 0.0
        %326 = vmatpush2.msra.mxu0 0.0
        %327 = vmatprep.subr.mxu0 0.0
        %328 = vmatpush2.msra.mxu0 0.0
        %329 = vmatprep.subr.mxu0 0.0
        %330 = vmatpush2.msra.mxu0 0.0
        %331 = vmatprep.subr.mxu0 0.0
        %332 = vmatpush2.msra.mxu0 0.0
        %333 = vmatprep.subr.mxu0 0.0
        %334 = vmatpush2.msra.mxu0 0.0
        %335 = vmatprep.subr.mxu0 0.0
        %336 = vmatpush2.msra.mxu0 0.0
        %337 = vmatprep.subr.mxu0 0.0
        %338 = vmatpush2.msra.mxu0 0.0
        %339 = vmatprep.subr.mxu0 0.0
        %340 = vmatpush2.msra.mxu0 0.0
        %341 = vmatprep.subr.mxu0 0.0
        %342 = vmatpush2.msra.mxu0 0.0
        %343 = vmatprep.subr.mxu0 0.0
        %344 = vmatpush2.msra.mxu0 0.0
        %345 = vmatprep.subr.mxu0 0.0
        %346 = vmatpush2.msra.mxu0 0.0
        %347 = vmatprep.subr.mxu0 0.0
        %348 = vmatpush2.msra.mxu0 0.0
        %349 = vmatprep.subr.mxu0 0.0
        %350 = vmatpush2.msra.mxu0 0.0
        %351 = vmatprep.subr.mxu0 0.0
        %352 = vmatpush2.msra.mxu0 0.0
        %353 = vmatprep.subr.mxu0 0.0
        %354 = vmatpush2.msra.mxu0 0.0
        %355 = vmatprep.subr.mxu0 0.0
        %356 = vmatpush2.msra.mxu0 0.0
        %357 = vmatprep.mubr.f32.mxu0 0.0
        %358 = vmatmul.mubr.f32.gmra.mxu0 %v206
        %v359 = vpop.f32.mrf.mxu0
        %v360 = vadd.f32 %v291, %v359
        %v361 = vpop.f32.mrf.mxu0
        %362 = vmatprep.mubr.f32.mxu0 0.0
        %363 = vmatmul.mubr.f32.gmra.mxu0 %v207
        %v364 = vpop.f32.mrf.mxu0
        %v365 = vadd.f32 %v291, %v364
        %v366 = vpop.f32.mrf.mxu0
        %367 = vmatprep.mubr.f32.mxu0 0.0
        %368 = vmatmul.mubr.f32.gmra.mxu0 %v208
        %v369 = vpop.f32.mrf.mxu0
        %v370 = vadd.f32 %v291, %v369
        %v371 = vpop.f32.mrf.mxu0
        %372 = vmatprep.mubr.f32.mxu0 0.0
        %373 = vmatmul.mubr.f32.gmra.mxu0 %v209
        %v374 = vpop.f32.mrf.mxu0
        %v375 = vadd.f32 %v291, %v374
        %v376 = vpop.f32.mrf.mxu0
        %377 = vmatprep.mubr.f32.mxu0 0.0
        %378 = vmatmul.mubr.f32.gmra.mxu0 %v210
        %v379 = vpop.f32.mrf.mxu0
        %v380 = vadd.f32 %v291, %v379
        %v381 = vpop.f32.mrf.mxu0
        %382 = vmatprep.mubr.f32.mxu0 0.0
        %383 = vmatmul.mubr.f32.gmra.mxu0 %v211
        %v384 = vpop.f32.mrf.mxu0
        %v385 = vadd.f32 %v291, %v384
        %v386 = vpop.f32.mrf.mxu0
        %387 = vmatprep.mubr.f32.mxu0 0.0
        %388 = vmatmul.mubr.f32.gmra.mxu0 %v212
        %v389 = vpop.f32.mrf.mxu0
        %v390 = vadd.f32 %v291, %v389
        %v391 = vpop.f32.mrf.mxu0
        %392 = vmatprep.mubr.f32.mxu0 0.0
        %393 = vmatmul.mubr.f32.gmra.mxu0 %v213
        %v394 = vpop.f32.mrf.mxu0
        %v395 = vadd.f32 %v291, %v394
        %v396 = vpop.f32.mrf.mxu0
        %397 = vmatprep.mubr.f32.mxu0 0.0
        %398 = vmatmul.mubr.f32.gmra.mxu0 %v214
        %v399 = vpop.f32.mrf.mxu0
        %v400 = vadd.f32 %v291, %v399
        %v401 = vpop.f32.mrf.mxu0
        %402 = vmatprep.mubr.f32.mxu0 0.0
        %403 = vmatmul.mubr.f32.gmra.mxu0 %v215
        %v404 = vpop.f32.mrf.mxu0
        %v405 = vadd.f32 %v291, %v404
        %v406 = vpop.f32.mrf.mxu0
        %407 = vmatprep.mubr.f32.mxu0 0.0
        %408 = vmatmul.mubr.f32.gmra.mxu0 %v216
        %v409 = vpop.f32.mrf.mxu0
        %v410 = vadd.f32 %v291, %v409
        %v411 = vpop.f32.mrf.mxu0
        %412 = vmatprep.mubr.f32.mxu0 0.0
        %413 = vmatmul.mubr.f32.gmra.mxu0 %v217
        %v414 = vpop.f32.mrf.mxu0
        %v415 = vadd.f32 %v291, %v414
        %v416 = vpop.f32.mrf.mxu0
        %417 = vmatprep.mubr.f32.mxu0 0.0
        %418 = vmatmul.mubr.f32.gmra.mxu0 %v218
        %v419 = vpop.f32.mrf.mxu0
        %v420 = vadd.f32 %v291, %v419
        %v421 = vpop.f32.mrf.mxu0
        %422 = vmatprep.mubr.f32.mxu0 0.0
        %423 = vmatmul.mubr.f32.gmra.mxu0 %v219
        %v424 = vpop.f32.mrf.mxu0
        %v425 = vadd.f32 %v291, %v424
        %v426 = vpop.f32.mrf.mxu0
        %427 = vmatprep.mubr.f32.mxu0 0.0
        %428 = vmatmul.mubr.f32.gmra.mxu0 %v220
        %v429 = vpop.f32.mrf.mxu0
        %v430 = vadd.f32 %v291, %v429
        %v431 = vpop.f32.mrf.mxu0
        %432 = vmatprep.mubr.f32.mxu0 0.0
        %433 = vmatmul.mubr.f32.gmra.mxu0 %v221
        %v434 = vpop.f32.mrf.mxu0
        %v435 = vadd.f32 %v291, %v434
        %v436 = vpop.f32.mrf.mxu0
        %437 = vmatprep.mubr.f32.mxu0 0.0
        %438 = vmatmul.mubr.f32.gmra.mxu0 %v222
        %v439 = vpop.f32.mrf.mxu0
        %v440 = vadd.f32 %v291, %v439
        %v441 = vpop.f32.mrf.mxu0
        %442 = vmatprep.mubr.f32.mxu0 0.0
        %443 = vmatmul.mubr.f32.gmra.mxu0 %v223
        %v444 = vpop.f32.mrf.mxu0
        %v445 = vadd.f32 %v291, %v444
        %v446 = vpop.f32.mrf.mxu0
        %447 = vmatprep.mubr.f32.mxu0 0.0
        %448 = vmatmul.mubr.f32.gmra.mxu0 %v224
        %v449 = vpop.f32.mrf.mxu0
        %v450 = vadd.f32 %v291, %v449
        %v451 = vpop.f32.mrf.mxu0
        %452 = vmatprep.mubr.f32.mxu0 0.0
        %453 = vmatmul.mubr.f32.gmra.mxu0 %v225
        %v454 = vpop.f32.mrf.mxu0
        %v455 = vadd.f32 %v291, %v454
        %v456 = vpop.f32.mrf.mxu0
        %457 = vmatprep.mubr.f32.mxu0 0.0
        %458 = vmatmul.mubr.f32.gmra.mxu0 %v226
        %v459 = vpop.f32.mrf.mxu0
        %v460 = vadd.f32 %v291, %v459
        %v461 = vpop.f32.mrf.mxu0
        %462 = vmatprep.mubr.f32.mxu0 0.0
        %463 = vmatmul.mubr.f32.gmra.mxu0 %v227
        %v464 = vpop.f32.mrf.mxu0
        %v465 = vadd.f32 %v291, %v464
        %v466 = vpop.f32.mrf.mxu0
        %467 = vmatprep.mubr.f32.mxu0 0.0
        %468 = vmatmul.mubr.f32.gmra.mxu0 %v228
        %v469 = vpop.f32.mrf.mxu0
        %v470 = vadd.f32 %v291, %v469
        %v471 = vpop.f32.mrf.mxu0
        %472 = vmatprep.mubr.f32.mxu0 0.0
        %473 = vmatmul.mubr.f32.gmra.mxu0 %v229
        %v474 = vpop.f32.mrf.mxu0
        %v475 = vadd.f32 %v291, %v474
        %v476 = vpop.f32.mrf.mxu0
        %477 = vmatprep.mubr.f32.mxu0 0.0
        %478 = vmatmul.mubr.f32.gmra.mxu0 %v230
        %v479 = vpop.f32.mrf.mxu0
        %v480 = vadd.f32 %v291, %v479
        %v481 = vpop.f32.mrf.mxu0
        %482 = vmatprep.mubr.f32.mxu0 0.0
        %483 = vmatmul.mubr.f32.gmra.mxu0 %v231
        %v484 = vpop.f32.mrf.mxu0
        %v485 = vadd.f32 %v291, %v484
        %v486 = vpop.f32.mrf.mxu0
        %487 = vmatprep.mubr.f32.mxu0 0.0
        %488 = vmatmul.mubr.f32.gmra.mxu0 %v232
        %v489 = vpop.f32.mrf.mxu0
        %v490 = vadd.f32 %v291, %v489
        %v491 = vpop.f32.mrf.mxu0
        %492 = vmatprep.mubr.f32.mxu0 0.0
        %493 = vmatmul.mubr.f32.gmra.mxu0 %v233
        %v494 = vpop.f32.mrf.mxu0
        %v495 = vadd.f32 %v291, %v494
        %v496 = vpop.f32.mrf.mxu0
        %497 = vmatprep.mubr.f32.mxu0 0.0
        %498 = vmatmul.mubr.f32.gmra.mxu0 %v234
        %v499 = vpop.f32.mrf.mxu0
        %v500 = vadd.f32 %v291, %v499
        %v501 = vpop.f32.mrf.mxu0
        %502 = vmatprep.mubr.f32.mxu0 0.0
        %503 = vmatmul.mubr.f32.gmra.mxu0 %v235
        %v504 = vpop.f32.mrf.mxu0
        %v505 = vadd.f32 %v291, %v504
        %v506 = vpop.f32.mrf.mxu0
        %507 = vmatprep.mubr.f32.mxu0 0.0
        %508 = vmatmul.mubr.f32.gmra.mxu0 %v236
        %v509 = vpop.f32.mrf.mxu0
        %v510 = vadd.f32 %v291, %v509
        %v511 = vpop.f32.mrf.mxu0
        %512 = vmatprep.mubr.f32.mxu0 0.0
        %513 = vmatmul.mubr.f32.gmra.mxu0 %v237
        %v514 = vpop.f32.mrf.mxu0
        %v515 = vadd.f32 %v291, %v514
        %v516 = vpop.f32.mrf.mxu0
        %517 = vmatprep.mubr.f32.mxu0 0.0
        %518 = vmatmul.mubr.f32.gmra.mxu0 %v238
        %v519 = vpop.f32.mrf.mxu0
        %v520 = vadd.f32 %v291, %v519
        %v521 = vpop.f32.mrf.mxu0
        %522 = vmatprep.mubr.f32.mxu0 0.0
        %523 = vmatmul.mubr.f32.gmra.mxu0 %v239
        %v524 = vpop.f32.mrf.mxu0
        %v525 = vadd.f32 %v291, %v524
        %v526 = vpop.f32.mrf.mxu0
        %527 = vmatprep.mubr.f32.mxu0 0.0
        %528 = vmatmul.mubr.f32.gmra.mxu0 %v240
        %v529 = vpop.f32.mrf.mxu0
        %v530 = vadd.f32 %v291, %v529
        %v531 = vpop.f32.mrf.mxu0
        %532 = vmatprep.mubr.f32.mxu0 0.0
        %533 = vmatmul.mubr.f32.gmra.mxu0 %v241
        %v534 = vpop.f32.mrf.mxu0
        %v535 = vadd.f32 %v291, %v534
        %v536 = vpop.f32.mrf.mxu0
        %537 = vmatprep.mubr.f32.mxu0 0.0
        %538 = vmatmul.mubr.f32.gmra.mxu0 %v242
        %v539 = vpop.f32.mrf.mxu0
        %v540 = vadd.f32 %v291, %v539
        %v541 = vpop.f32.mrf.mxu0
        %542 = vmatprep.mubr.f32.mxu0 0.0
        %543 = vmatmul.mubr.f32.gmra.mxu0 %v243
        %v544 = vpop.f32.mrf.mxu0
        %v545 = vadd.f32 %v291, %v544
        %v546 = vpop.f32.mrf.mxu0
        %547 = vmatprep.mubr.f32.mxu0 0.0
        %548 = vmatmul.mubr.f32.gmra.mxu0 %v244
        %v549 = vpop.f32.mrf.mxu0
        %v550 = vadd.f32 %v291, %v549
        %v551 = vpop.f32.mrf.mxu0
        %552 = vmatprep.mubr.f32.mxu0 0.0
        %553 = vmatmul.mubr.f32.gmra.mxu0 %v245
        %v554 = vpop.f32.mrf.mxu0
        %v555 = vadd.f32 %v291, %v554
        %v556 = vpop.f32.mrf.mxu0
        %557 = vmatprep.mubr.f32.mxu0 0.0
        %558 = vmatmul.mubr.f32.gmra.mxu0 %v246
        %v559 = vpop.f32.mrf.mxu0
        %v560 = vadd.f32 %v291, %v559
        %v561 = vpop.f32.mrf.mxu0
        %562 = vmatprep.mubr.f32.mxu0 0.0
        %563 = vmatmul.mubr.f32.gmra.mxu0 %v247
        %v564 = vpop.f32.mrf.mxu0
        %v565 = vadd.f32 %v291, %v564
        %v566 = vpop.f32.mrf.mxu0
        %567 = vmatprep.mubr.f32.mxu0 0.0
        %568 = vmatmul.mubr.f32.gmra.mxu0 %v248
        %v569 = vpop.f32.mrf.mxu0
        %v570 = vadd.f32 %v291, %v569
        %v571 = vpop.f32.mrf.mxu0
        %572 = vmatprep.mubr.f32.mxu0 0.0
        %573 = vmatmul.mubr.f32.gmra.mxu0 %v249
        %v574 = vpop.f32.mrf.mxu0
        %v575 = vadd.f32 %v291, %v574
        %v576 = vpop.f32.mrf.mxu0
        %577 = vmatprep.mubr.f32.mxu0 0.0
        %578 = vmatmul.mubr.f32.gmra.mxu0 %v250
        %v579 = vpop.f32.mrf.mxu0
        %v580 = vadd.f32 %v291, %v579
        %v581 = vpop.f32.mrf.mxu0
        %582 = vmatprep.mubr.f32.mxu0 0.0
        %583 = vmatmul.mubr.f32.gmra.mxu0 %v251
        %v584 = vpop.f32.mrf.mxu0
        %v585 = vadd.f32 %v291, %v584
        %v586 = vpop.f32.mrf.mxu0
        %587 = vmatprep.mubr.f32.mxu0 0.0
        %588 = vmatmul.mubr.f32.gmra.mxu0 %v252
        %v589 = vpop.f32.mrf.mxu0
        %v590 = vadd.f32 %v291, %v589
        %v591 = vpop.f32.mrf.mxu0
        %592 = vmatprep.mubr.f32.mxu0 0.0
        %593 = vmatmul.mubr.f32.gmra.mxu0 %v253
        %v594 = vpop.f32.mrf.mxu0
        %v595 = vadd.f32 %v291, %v594
        %v596 = vpop.f32.mrf.mxu0
        %597 = vmatprep.mubr.f32.mxu0 0.0
        %598 = vmatmul.mubr.f32.gmra.mxu0 %v254
        %v599 = vpop.f32.mrf.mxu0
        %v600 = vadd.f32 %v291, %v599
        %v601 = vpop.f32.mrf.mxu0
        %602 = vmatprep.mubr.f32.mxu0 0.0
        %603 = vmatmul.mubr.f32.gmra.mxu0 %v255
        %v604 = vpop.f32.mrf.mxu0
        %v605 = vadd.f32 %v291, %v604
        %v606 = vpop.f32.mrf.mxu0
        %607 = vmatprep.mubr.f32.mxu0 0.0
        %608 = vmatmul.mubr.f32.gmra.mxu0 %v256
        %v609 = vpop.f32.mrf.mxu0
        %v610 = vadd.f32 %v291, %v609
        %v611 = vpop.f32.mrf.mxu0
        %612 = vmatprep.mubr.f32.mxu0 0.0
        %613 = vmatmul.mubr.f32.gmra.mxu0 %v257
        %v614 = vpop.f32.mrf.mxu0
        %v615 = vadd.f32 %v291, %v614
        %v616 = vpop.f32.mrf.mxu0
        %617 = vmatprep.mubr.f32.mxu0 0.0
        %618 = vmatmul.mubr.f32.gmra.mxu0 %v258
        %v619 = vpop.f32.mrf.mxu0
        %v620 = vadd.f32 %v291, %v619
        %v621 = vpop.f32.mrf.mxu0
        %622 = vmatprep.mubr.f32.mxu0 0.0
        %623 = vmatmul.mubr.f32.gmra.mxu0 %v259
        %v624 = vpop.f32.mrf.mxu0
        %v625 = vadd.f32 %v291, %v624
        %v626 = vpop.f32.mrf.mxu0
        %627 = vmatprep.mubr.f32.mxu0 0.0
        %628 = vmatmul.mubr.f32.gmra.mxu0 %v260
        %v629 = vpop.f32.mrf.mxu0
        %v630 = vadd.f32 %v291, %v629
        %v631 = vpop.f32.mrf.mxu0
        %632 = vmatprep.mubr.f32.mxu0 0.0
        %633 = vmatmul.mubr.f32.gmra.mxu0 %v261
        %v634 = vpop.f32.mrf.mxu0
        %v635 = vadd.f32 %v291, %v634
        %v636 = vpop.f32.mrf.mxu0
        %637 = vmatprep.mubr.f32.mxu0 0.0
        %638 = vmatmul.mubr.f32.gmra.mxu0 %v262
        %v639 = vpop.f32.mrf.mxu0
        %v640 = vadd.f32 %v291, %v639
        %v641 = vpop.f32.mrf.mxu0
        %642 = vmatprep.mubr.f32.mxu0 0.0
        %643 = vmatmul.mubr.f32.gmra.mxu0 %v263
        %v644 = vpop.f32.mrf.mxu0
        %v645 = vadd.f32 %v291, %v644
        %v646 = vpop.f32.mrf.mxu0
        %647 = vmatprep.mubr.f32.mxu0 0.0
        %648 = vmatmul.mubr.f32.gmra.mxu0 %v264
        %v649 = vpop.f32.mrf.mxu0
        %v650 = vadd.f32 %v291, %v649
        %v651 = vpop.f32.mrf.mxu0
        %652 = vmatprep.mubr.f32.mxu0 0.0
        %653 = vmatmul.mubr.f32.gmra.mxu0 %v265
        %v654 = vpop.f32.mrf.mxu0
        %v655 = vadd.f32 %v291, %v654
        %v656 = vpop.f32.mrf.mxu0
        %657 = vmatprep.mubr.f32.mxu0 0.0
        %658 = vmatmul.mubr.f32.gmra.mxu0 %v266
        %v659 = vpop.f32.mrf.mxu0
        %v660 = vadd.f32 %v291, %v659
        %v661 = vpop.f32.mrf.mxu0
        %662 = vmatprep.mubr.f32.mxu0 0.0
        %663 = vmatmul.mubr.f32.gmra.mxu0 %v267
        %v664 = vpop.f32.mrf.mxu0
        %v665 = vadd.f32 %v291, %v664
        %v666 = vpop.f32.mrf.mxu0
        %667 = vmatprep.mubr.f32.mxu0 0.0
        %668 = vmatmul.mubr.f32.gmra.mxu0 %v268
        %v669 = vpop.f32.mrf.mxu0
        %v670 = vadd.f32 %v291, %v669
        %v671 = vpop.f32.mrf.mxu0
        %672 = vmatprep.mubr.f32.mxu0 0.0
        %673 = vmatmul.mubr.f32.gmra.mxu0 %v269
        %v674 = vpop.f32.mrf.mxu0
        %v675 = vadd.f32 %v291, %v674
        %v676 = vpop.f32.mrf.mxu0
        %677 = vdwg.mxu0
        %v678 = vmax.f32 %v360, 0.0
        %v679 = vmax.f32 %v365, 0.0
        %v680 = vmax.f32 %v370, 0.0
        %v681 = vmax.f32 %v375, 0.0
        %v682 = vmax.f32 %v380, 0.0
        %v683 = vmax.f32 %v385, 0.0
        %v684 = vmax.f32 %v390, 0.0
        %v685 = vmax.f32 %v395, 0.0
        %v686 = vmax.f32 %v400, 0.0
        %v687 = vmax.f32 %v405, 0.0
        %v688 = vmax.f32 %v410, 0.0
        %v689 = vmax.f32 %v415, 0.0
        %v690 = vmax.f32 %v420, 0.0
        %v691 = vmax.f32 %v425, 0.0
        %v692 = vmax.f32 %v430, 0.0
        %v693 = vmax.f32 %v435, 0.0
        %v694 = vmax.f32 %v440, 0.0
        %v695 = vmax.f32 %v445, 0.0
        %v696 = vmax.f32 %v450, 0.0
        %v697 = vmax.f32 %v455, 0.0
        %v698 = vmax.f32 %v460, 0.0
        %v699 = vmax.f32 %v465, 0.0
        %v700 = vmax.f32 %v470, 0.0
        %v701 = vmax.f32 %v475, 0.0
        %v702 = vmax.f32 %v480, 0.0
        %v703 = vmax.f32 %v485, 0.0
        %v704 = vmax.f32 %v490, 0.0
        %v705 = vmax.f32 %v495, 0.0
        %v706 = vmax.f32 %v500, 0.0
        %v707 = vmax.f32 %v505, 0.0
        %v708 = vmax.f32 %v510, 0.0
        %v709 = vmax.f32 %v515, 0.0
        %v710 = vmax.f32 %v520, 0.0
        %v711 = vmax.f32 %v525, 0.0
        %v712 = vmax.f32 %v530, 0.0
        %v713 = vmax.f32 %v535, 0.0
        %v714 = vmax.f32 %v540, 0.0
        %v715 = vmax.f32 %v545, 0.0
        %v716 = vmax.f32 %v550, 0.0
        %v717 = vmax.f32 %v555, 0.0
        %v718 = vmax.f32 %v560, 0.0
        %v719 = vmax.f32 %v565, 0.0
        %v720 = vmax.f32 %v570, 0.0
        %v721 = vmax.f32 %v575, 0.0
        %v722 = vmax.f32 %v580, 0.0
        %v723 = vmax.f32 %v585, 0.0
        %v724 = vmax.f32 %v590, 0.0
        %v725 = vmax.f32 %v595, 0.0
        %v726 = vmax.f32 %v600, 0.0
        %v727 = vmax.f32 %v605, 0.0
        %v728 = vmax.f32 %v610, 0.0
        %v729 = vmax.f32 %v615, 0.0
        %v730 = vmax.f32 %v620, 0.0
        %v731 = vmax.f32 %v625, 0.0
        %v732 = vmax.f32 %v630, 0.0
        %v733 = vmax.f32 %v635, 0.0
        %v734 = vmax.f32 %v640, 0.0
        %v735 = vmax.f32 %v645, 0.0
        %v736 = vmax.f32 %v650, 0.0
        %v737 = vmax.f32 %v655, 0.0
        %v738 = vmax.f32 %v660, 0.0
        %v739 = vmax.f32 %v665, 0.0
        %v740 = vmax.f32 %v670, 0.0
        %v741 = vmax.f32 %v675, 0.0
        %742 = vst [vmem:[%s203] sm:$0xff] %v678
        %743 = vst [vmem:[%s203 + $0x8] sm:$0xff] %v679
        %744 = vst [vmem:[%s203 + $0x10] sm:$0xff] %v680
        %745 = vst [vmem:[%s203 + $0x18] sm:$0xff] %v681
        %746 = vst [vmem:[%s203 + $0x20] sm:$0xff] %v682
        %747 = vst [vmem:[%s203 + $0x28] sm:$0xff] %v683
        %748 = vst [vmem:[%s203 + $0x30] sm:$0xff] %v684
        %749 = vst [vmem:[%s203 + $0x38] sm:$0xff] %v685
        %750 = vst [vmem:[%s203 + $0x40] sm:$0xff] %v686
        %751 = vst [vmem:[%s203 + $0x48] sm:$0xff] %v687
        %752 = vst [vmem:[%s203 + $0x50] sm:$0xff] %v688
        %753 = vst [vmem:[%s203 + $0x58] sm:$0xff] %v689
        %754 = vst [vmem:[%s203 + $0x60] sm:$0xff] %v690
        %755 = vst [vmem:[%s203 + $0x68] sm:$0xff] %v691
        %756 = vst [vmem:[%s203 + $0x70] sm:$0xff] %v692
        %757 = vst [vmem:[%s203 + $0x78] sm:$0xff] %v693
        %758 = vst [vmem:[%s203 + $0x80] sm:$0xff] %v694
        %759 = vst [vmem:[%s203 + $0x88] sm:$0xff] %v695
        %760 = vst [vmem:[%s203 + $0x90] sm:$0xff] %v696
        %761 = vst [vmem:[%s203 + $0x98] sm:$0xff] %v697
        %762 = vst [vmem:[%s203 + $0xa0] sm:$0xff] %v698
        %763 = vst [vmem:[%s203 + $0xa8] sm:$0xff] %v699
        %764 = vst [vmem:[%s203 + $0xb0] sm:$0xff] %v700
        %765 = vst [vmem:[%s203 + $0xb8] sm:$0xff] %v701
        %766 = vst [vmem:[%s203 + $0xc0] sm:$0xff] %v702
        %767 = vst [vmem:[%s203 + $0xc8] sm:$0xff] %v703
        %768 = vst [vmem:[%s203 + $0xd0] sm:$0xff] %v704
        %769 = vst [vmem:[%s203 + $0xd8] sm:$0xff] %v705
        %770 = vst [vmem:[%s203 + $0xe0] sm:$0xff] %v706
        %771 = vst [vmem:[%s203 + $0xe8] sm:$0xff] %v707
        %772 = vst [vmem:[%s203 + $0xf0] sm:$0xff] %v708
        %773 = vst [vmem:[%s203 + $0xf8] sm:$0xff] %v709
        %774 = vst [vmem:[%s203 + $0x100] sm:$0xff] %v710
        %775 = vst [vmem:[%s203 + $0x108] sm:$0xff] %v711
        %776 = vst [vmem:[%s203 + $0x110] sm:$0xff] %v712
        %777 = vst [vmem:[%s203 + $0x118] sm:$0xff] %v713
        %778 = vst [vmem:[%s203 + $0x120] sm:$0xff] %v714
        %779 = vst [vmem:[%s203 + $0x128] sm:$0xff] %v715
        %780 = vst [vmem:[%s203 + $0x130] sm:$0xff] %v716
        %781 = vst [vmem:[%s203 + $0x138] sm:$0xff] %v717
        %782 = vst [vmem:[%s203 + $0x140] sm:$0xff] %v718
        %783 = vst [vmem:[%s203 + $0x148] sm:$0xff] %v719
        %784 = vst [vmem:[%s203 + $0x150] sm:$0xff] %v720
        %785 = vst [vmem:[%s203 + $0x158] sm:$0xff] %v721
        %786 = vst [vmem:[%s203 + $0x160] sm:$0xff] %v722
        %787 = vst [vmem:[%s203 + $0x168] sm:$0xff] %v723
        %788 = vst [vmem:[%s203 + $0x170] sm:$0xff] %v724
        %789 = vst [vmem:[%s203 + $0x178] sm:$0xff] %v725
        %790 = vst [vmem:[%s203 + $0x180] sm:$0xff] %v726
        %791 = vst [vmem:[%s203 + $0x188] sm:$0xff] %v727
        %792 = vst [vmem:[%s203 + $0x190] sm:$0xff] %v728
        %793 = vst [vmem:[%s203 + $0x198] sm:$0xff] %v729
        %794 = vst [vmem:[%s203 + $0x1a0] sm:$0xff] %v730
        %795 = vst [vmem:[%s203 + $0x1a8] sm:$0xff] %v731
        %796 = vst [vmem:[%s203 + $0x1b0] sm:$0xff] %v732
        %797 = vst [vmem:[%s203 + $0x1b8] sm:$0xff] %v733
        %798 = vst [vmem:[%s203 + $0x1c0] sm:$0xff] %v734
        %799 = vst [vmem:[%s203 + $0x1c8] sm:$0xff] %v735
        %800 = vst [vmem:[%s203 + $0x1d0] sm:$0xff] %v736
        %801 = vst [vmem:[%s203 + $0x1d8] sm:$0xff] %v737
        %802 = vst [vmem:[%s203 + $0x1e0] sm:$0xff] %v738
        %803 = vst [vmem:[%s203 + $0x1e8] sm:$0xff] %v739
        %804 = vst [vmem:[%s203 + $0x1f0] sm:$0xff] %v740
        %805 = vst [vmem:[%s203 + $0x1f8] sm:$0xff] %v741
        %s806 = sand.u32 %s97, 1
        %s807 = scalar_lea.sflag [#allocation4], %s806
        %s808 = sand.u32 %s97, 1
        %s809 = smul.addr %s808, 512
        %s810 = scalar_lea.vmem [#allocation7], %s809
        // Predicated region
        $region41: #{tpu_custom_call.1} parent=31 // pred_check
          %p811 = pneg %p107
        $region42: #{tpu_custom_call.1} parent=31 // pred_check_branch
          %813 = sbr.rel (%p811) target = $region44
        $region43: #{tpu_custom_call.1} parent=31 // pred_region
          %s814 = smul.u32 64, %s21
          %s816 = ssub.s32 8192, 8192
          %817 = vsyncadd %s807, %s816
          %s818 = smul.addr %s814, 128
          %s819 = scalar_lea.hbm %s3, %s818
          %s820 = sshll.u32 %s810, 4
          %s821 = int_to_ptr.vmem [resolvable:$true] %s820
          %826 = dma.vmem_to_hbm [thread:$0]  %s821, 8192, %s819, %s807, 128, 128, 8
        $region44: #{tpu_custom_call.1} parent=31 // pred_fallthru
          _
      $region32: #{tpu_custom_call.1} parent=5 // pred_fallthru
        _
      %p827 = scmp.le.s32.totalorder 2, %s16
      // Predicated region
      $region45: #{tpu_custom_call.1} parent=5 // pred_check
        %p828 = pneg %p827
      $region46: #{tpu_custom_call.1} parent=5 // pred_check_branch
        %830 = sbr.rel (%p828) target = $region48
      $region47: #{tpu_custom_call.1} parent=5 // pred_region
        %s831 = ssub.s32 %s16, 2
        // Predicated region
        $region49: #{tpu_custom_call.1} parent=47 // pred_check
          %p832 = pneg %p113
        $region50: #{tpu_custom_call.1} parent=47 // pred_check_branch
          %834 = sbr.rel (%p832) target = $region52
        $region51: #{tpu_custom_call.1} parent=47 // pred_region
          %s835 = sand.u32 %s98, 1
          %s836 = scalar_lea.sflag [#allocation4], %s835
          %s837 = sand.u32 %s98, 1
          %s838 = smul.addr %s837, 512
          %s839 = scalar_lea.vmem [#allocation7], %s838
          %840 = dma.done %s836, 8192
        $region52: #{tpu_custom_call.1} parent=47 // pred_fallthru
          _
      $region48: #{tpu_custom_call.1} parent=5 // pred_fallthru
        _
    $region6: #{tpu_custom_call.1} parent=1 // loop_footer
      %s20 = sadd.s32 1, %s16
    $region7: #{tpu_custom_call.1} parent=1 // loop_footer_branch
      %15 = sbr.rel target = $region3
    $region8: #{tpu_custom_call.1} parent=1 // loop_exit
      _
    %841 = vsyncpa [#allocation3], 1
    %s842 = scalar_lea.sflag [#allocation3], 1
    %843 = vsyncpa %s842, 1
    %844 = vsyncpa [#allocation6], 1
    %845 = vsyncpa [#allocation4], 1
    %s846 = scalar_lea.sflag [#allocation4], 1
    %847 = vsyncpa %s846, 1

</llo_original>
